<compile_context>
chip_gen: v7x
topology: tpu7x:2x2x1
jax: 0.10.0
libtpu: 0.0.40
codegen_flags: <defaults>
</compile_context>

<pallas_src>
import functools

import jax
import jax.numpy as jnp
from jax.experimental import pallas as pl
from jax.experimental.pallas import tpu as pltpu


def _round_up(x, m):
    return ((x + m - 1) // m) * m


# ----------------------------- Pallas kernels ------------------------------


def _gemm_stats_kernel(p_ref, w_ref, b_ref, y_ref, sum_ref, sq_ref, *,
                       tile_m, m_actual):
    """One M-tile of the conv GEMM: y = p @ w + b, plus partial column stats.

    p_ref: [TILE_M, Kp] bf16, w_ref: [Kp, Cp] bf16, b_ref: [1, Cp] f32.
    y_ref: [TILE_M, Cp] f32; sum_ref/sq_ref: [8, Cp] f32 partial reductions.
    """
    i = pl.program_id(0)
    y = jnp.dot(p_ref[...], w_ref[...],
                preferred_element_type=jnp.float32) + b_ref[...]
    y_ref[...] = y

    # Mask rows that are padding of the M dimension so they do not pollute the
    # BatchNorm batch statistics.
    rows = jax.lax.broadcasted_iota(jnp.int32, y.shape, 0) + i * tile_m
    yv = jnp.where(rows < m_actual, y, 0.0)

    cp = y.shape[1]
    yv3 = yv.reshape(tile_m // 8, 8, cp)       # layout-preserving sublane regroup
    sum_ref[...] = jnp.sum(yv3, axis=0)        # [8, Cp] partial sums
    sq_ref[...] = jnp.sum(yv3 * yv3, axis=0)   # [8, Cp] partial sums of squares


def _bn_relu_kernel(y_ref, mean_ref, invstd_ref, gamma_ref, beta_ref, o_ref):
    # y_ref: [TILE_M, Cp] f32; the rest are [1, Cp] row vectors (broadcast).
    yhat = (y_ref[...] - mean_ref[...]) * invstd_ref[...]
    o_ref[...] = jnp.maximum(yhat * gamma_ref[...] + beta_ref[...], 0.0)


# --------------------------- pallas_call wrappers ----------------------------


def _conv_gemm_stats(patches_bf16, w_bf16, bias_row, *, m_actual, tile_m):
    m_pad, kp = patches_bf16.shape
    cp = w_bf16.shape[1]
    grid_m = m_pad // tile_m
    kernel = functools.partial(_gemm_stats_kernel, tile_m=tile_m, m_actual=m_actual)
    return pl.pallas_call(
        kernel,
        out_shape=(
            jax.ShapeDtypeStruct((m_pad, cp), jnp.float32),        # y
            jax.ShapeDtypeStruct((grid_m * 8, cp), jnp.float32),   # partial sums
            jax.ShapeDtypeStruct((grid_m * 8, cp), jnp.float32),   # partial sumsq
        ),
        grid=(grid_m,),
        in_specs=[
            pl.BlockSpec((tile_m, kp), lambda i: (i, 0)),  # streamed patch tile
            pl.BlockSpec((kp, cp), lambda i: (0, 0)),      # resident weights
            pl.BlockSpec((1, cp), lambda i: (0, 0)),       # resident bias
        ],
        out_specs=(
            pl.BlockSpec((tile_m, cp), lambda i: (i, 0)),
            pl.BlockSpec((8, cp), lambda i: (i, 0)),
            pl.BlockSpec((8, cp), lambda i: (i, 0)),
        ),
        compiler_params=pltpu.CompilerParams(dimension_semantics=("parallel",)),
    )(patches_bf16, w_bf16, bias_row)


def _bn_relu(y, mean_row, invstd_row, gamma_row, beta_row, *, tile_m):
    m_pad, cp = y.shape
    grid_m = m_pad // tile_m
    row_spec = pl.BlockSpec((1, cp), lambda i: (0, 0))
    return pl.pallas_call(
        _bn_relu_kernel,
        out_shape=jax.ShapeDtypeStruct((m_pad, cp), jnp.float32),
        grid=(grid_m,),
        in_specs=[pl.BlockSpec((tile_m, cp), lambda i: (i, 0)),
                  row_spec, row_spec, row_spec, row_spec],
        out_specs=pl.BlockSpec((tile_m, cp), lambda i: (i, 0)),
        input_output_aliases={0: 0},   # normalize in place over y
        compiler_params=pltpu.CompilerParams(dimension_semantics=("parallel",)),
    )(y, mean_row, invstd_row, gamma_row, beta_row)


# ------------------------------- JAX glue -----------------------------------


def im2col(x_nhwc, k, stride, pad):
    """Extract kxk patches. Returns [N*H_out*W_out, k*k*C] with (kh, kw, c) order."""
    N, H, W, C = x_nhwc.shape
    xp = jnp.pad(x_nhwc, ((0, 0), (pad, pad), (pad, pad), (0, 0)))
    H_out = (H + 2 * pad - k) // stride + 1
    W_out = (W + 2 * pad - k) // stride + 1
    cols = []
    for kh in range(k):
        for kw in range(k):
            cols.append(
                xp[:, kh:kh + stride * (H_out - 1) + 1:stride,
                      kw:kw + stride * (W_out - 1) + 1:stride, :]
            )
    patches = jnp.stack(cols, axis=3)  # [N, H_out, W_out, k*k, C]
    return patches.reshape(N * H_out * W_out, k * k * C), (N, H_out, W_out)


def conv_bn_relu_block(x_nhwc, w_oihw, bias, gamma, beta, *,
                       stride=2, pad=1, eps=1e-5):
    Cout, Cin, kh, kw = w_oihw.shape
    patches, (N, H_out, W_out) = im2col(x_nhwc, kh, stride, pad)
    M, K = patches.shape

    # Lane-dense channel padding and sublane-friendly K padding.
    Cp = _round_up(Cout, 128)
    Kp = _round_up(K, 8)

    tile_m = min(512, _round_up(M, 16))
    M_pad = _round_up(M, tile_m)

    patches_bf16 = jnp.pad(patches, ((0, M_pad - M), (0, Kp - K))).astype(jnp.bfloat16)

    # PyTorch weight [Cout, Cin, kh, kw] -> [kh, kw, Cin, Cout] -> [K, Cout],
    # matching the (kh, kw, c) patch ordering of im2col.
    w_mat = jnp.transpose(w_oihw, (2, 3, 1, 0)).reshape(K, Cout)
    w_p = jnp.pad(w_mat, ((0, Kp - K), (0, Cp - Cout))).astype(jnp.bfloat16)
    b_row = jnp.pad(bias, (0, Cp - Cout)).reshape(1, Cp).astype(jnp.float32)

    y, psum, psq = _conv_gemm_stats(patches_bf16, w_p, b_row,
                                    m_actual=M, tile_m=tile_m)

    # BatchNorm2d training-mode statistics over (N, H, W): biased variance,
    # eps = 1e-5 (PyTorch default). The heavy reductions over M already ran
    # inside the GEMM kernel; here we only fold the tiny partials.
    total = jnp.sum(psum, axis=0)       # [Cp]
    total_sq = jnp.sum(psq, axis=0)     # [Cp]
    mean = total / M
    var = total_sq / M - mean * mean
    invstd = jax.lax.rsqrt(var + eps)

    gamma_row = jnp.pad(gamma, (0, Cp - Cout)).reshape(1, Cp).astype(jnp.float32)
    beta_row = jnp.pad(beta, (0, Cp - Cout)).reshape(1, Cp).astype(jnp.float32)

    out = _bn_relu(y, mean.reshape(1, Cp), invstd.reshape(1, Cp),
                   gamma_row, beta_row, tile_m=tile_m)
    return out[:M, :Cout].reshape(N, H_out, W_out, Cout)


def init_patch_embedding_params(key, input_channels, output_channels, k=3):
    mid = output_channels // 2
    k1, k2, k3, k4 = jax.random.split(key, 4)

    def conv_init(kw_, kb_, cout, cin):
        bound = 1.0 / jnp.sqrt(cin * k * k)
        w = jax.random.uniform(kw_, (cout, cin, k, k), jnp.float32, -bound, bound)
        b = jax.random.uniform(kb_, (cout,), jnp.float32, -bound, bound)
        return w, b

    w1, b1 = conv_init(k1, k2, mid, input_channels)
    w2, b2 = conv_init(k3, k4, output_channels, mid)
    return {
        "w1": w1, "b1": b1,
        "g1": jnp.ones((mid,), jnp.float32), "be1": jnp.zeros((mid,), jnp.float32),
        "w2": w2, "b2": b2,
        "g2": jnp.ones((output_channels,), jnp.float32),
        "be2": jnp.zeros((output_channels,), jnp.float32),
    }


@jax.jit
def patch_embedding_forward(x_nchw, params):
    x = jnp.transpose(x_nchw, (0, 2, 3, 1))  # NCHW -> NHWC
    x = conv_bn_relu_block(x, params["w1"], params["b1"], params["g1"], params["be1"])
    x = conv_bn_relu_block(x, params["w2"], params["b2"], params["g2"], params["be2"])
    return jnp.transpose(x, (0, 3, 1, 2))    # NHWC -> NCHW (PyTorch output layout)


# ------------------------------ reference -----------------------------------


def reference_forward(x_nchw, params, eps=1e-5):
    """Pure-JAX reference. Conv inputs are rounded to bf16 with f32 accumulation
    to match the kernel's MXU precision; all BN/ReLU math is f32."""

    def block(x, w, b, g, be):
        y = jax.lax.conv_general_dilated(
            x.astype(jnp.bfloat16), w.astype(jnp.bfloat16),
            window_strides=(2, 2), padding=((1, 1), (1, 1)),
            dimension_numbers=("NCHW", "OIHW", "NCHW"),
            preferred_element_type=jnp.float32,
        ) + b[None, :, None, None]
        mean = jnp.mean(y, axis=(0, 2, 3), keepdims=True)
        var = jnp.mean((y - mean) ** 2, axis=(0, 2, 3), keepdims=True)
        yhat = (y - mean) / jnp.sqrt(var + eps)
        return jnp.maximum(yhat * g[None, :, None, None] + be[None, :, None, None], 0.0)

    x = block(x_nchw, params["w1"], params["b1"], params["g1"], params["be1"])
    x = block(x, params["w2"], params["b2"], params["g2"], params["be2"])
    return x


# --------------------------------- main --------------------------------------

if __name__ == "__main__":
    key = jax.random.PRNGKey(0)
    kx, kp = jax.random.split(key)

    N, C_in, H, W = 2, 4, 16, 16
    C_out = 32

    x = jax.random.normal(kx, (N, C_in, H, W), jnp.float32)
    params = init_patch_embedding_params(kp, C_in, C_out)

    out = patch_embedding_forward(x, params)
    out = jax.block_until_ready(out)
    assert out.shape == (N, C_out, H // 4, W // 4), out.shape

    ref = jax.block_until_ready(reference_forward(x, params))
    err = float(jnp.max(jnp.abs(out - ref)))
    assert jnp.allclose(out, ref, atol=1e-2, rtol=1e-2), err

    print("KERNEL_OK")
</pallas_src>

<mosaic_0001>
module attributes {stable_mosaic.version = 11 : i64} {
  func.func @_gemm_stats_kernel(%arg0: i32, %arg1: memref<128x40xbf16, #tpu.memory_space<vmem>>, %arg2: memref<40x128xbf16, #tpu.memory_space<vmem>>, %arg3: memref<1x128xf32, #tpu.memory_space<vmem>>, %arg4: memref<128x128xf32, #tpu.memory_space<vmem>>, %arg5: memref<8x128xf32, #tpu.memory_space<vmem>>, %arg6: memref<8x128xf32, #tpu.memory_space<vmem>>) attributes {dimension_semantics = [#tpu.dimension_semantics<parallel>], iteration_bounds = array<i64: 1>, scalar_prefetch = 0 : i64, scratch_operands = 0 : i64, tpu.core_type = #tpu.core_type<tc>, window_params = [{transform_indices = @transform_0, window_bounds = array<i64: 128, 40>}, {pipeline_mode = #tpu.pipeline_mode<synchronous>, transform_indices = @transform_1, window_bounds = array<i64: 40, 128>}, {pipeline_mode = #tpu.pipeline_mode<synchronous>, transform_indices = @transform_2, window_bounds = array<i64: 1, 128>}, {transform_indices = @transform_3, window_bounds = array<i64: 128, 128>}, {transform_indices = @transform_4, window_bounds = array<i64: 8, 128>}, {transform_indices = @transform_5, window_bounds = array<i64: 8, 128>}]} {
    %c0 = arith.constant 0 : index
    %c0_0 = arith.constant 0 : index
    %0 = vector.load %arg1[%c0, %c0_0] : memref<128x40xbf16, #tpu.memory_space<vmem>>, vector<128x40xbf16>
    %c0_1 = arith.constant 0 : index
    %c0_2 = arith.constant 0 : index
    %1 = vector.load %arg2[%c0_1, %c0_2] : memref<40x128xbf16, #tpu.memory_space<vmem>>, vector<40x128xbf16>
    %cst = arith.constant dense<0.000000e+00> : vector<128x128xf32>
    %2 = tpu.matmul %0, %1, %cst {dimension_numbers = #tpu.dot_dimension_numbers<[1], [0], [0], [1], [0, 0, 1, 1], [], []>} : vector<128x40xbf16>, vector<40x128xbf16>, vector<128x128xf32> -> vector<128x128xf32>
    %c0_3 = arith.constant 0 : index
    %c0_4 = arith.constant 0 : index
    %3 = vector.load %arg3[%c0_3, %c0_4] : memref<1x128xf32, #tpu.memory_space<vmem>>, vector<1x128xf32>
    %4 = vector.broadcast %3 : vector<1x128xf32> to vector<128x128xf32>
    %5 = arith.addf %2, %4 : vector<128x128xf32>
    %c0_5 = arith.constant 0 : index
    %c0_6 = arith.constant 0 : index
    %6 = vector.load %arg4[%c0_5, %c0_6] : memref<128x128xf32, #tpu.memory_space<vmem>>, vector<128x128xf32>
    tpu.vector_store %arg4[%c0_5, %c0_6], %5 {strides = array<i32>} : memref<128x128xf32, #tpu.memory_space<vmem>>, vector<128x128xf32>,
    %7 = tpu.iota {dimensions = array<i32: 0>} : vector<128x128xi32>
    %c128_i32 = arith.constant 128 : i32
    %8 = arith.muli %arg0, %c128_i32 : i32
    %9 = vector.broadcast %8 : i32 to vector<128x128xi32>
    %10 = arith.addi %7, %9 : vector<128x128xi32>
    %c128_i32_7 = arith.constant 128 : i32
    %11 = vector.broadcast %c128_i32_7 : i32 to vector<128x128xi32>
    %12 = arith.cmpi slt, %10, %11 : vector<128x128xi32>
    %cst_8 = arith.constant 0.000000e+00 : f32
    %13 = vector.broadcast %cst_8 : f32 to vector<128x128xf32>
    %14 = arith.select %12, %5, %13 : vector<128x128xi1>, vector<128x128xf32>
    %15 = vector.shape_cast %14 : vector<128x128xf32> to vector<16x8x128xf32>
    %cst_9 = arith.constant dense<0.000000e+00> : vector<8x128xf32>
    %16 = vector.multi_reduction <add>, %15, %cst_9 [0] : vector<16x8x128xf32> to vector<8x128xf32>
    %c0_10 = arith.constant 0 : index
    %c0_11 = arith.constant 0 : index
    %17 = vector.load %arg5[%c0_10, %c0_11] : memref<8x128xf32, #tpu.memory_space<vmem>>, vector<8x128xf32>
    tpu.vector_store %arg5[%c0_10, %c0_11], %16 {strides = array<i32>} : memref<8x128xf32, #tpu.memory_space<vmem>>, vector<8x128xf32>,
    %18 = arith.mulf %15, %15 : vector<16x8x128xf32>
    %cst_12 = arith.constant dense<0.000000e+00> : vector<8x128xf32>
    %19 = vector.multi_reduction <add>, %18, %cst_12 [0] : vector<16x8x128xf32> to vector<8x128xf32>
    %c0_13 = arith.constant 0 : index
    %c0_14 = arith.constant 0 : index
    %20 = vector.load %arg6[%c0_13, %c0_14] : memref<8x128xf32, #tpu.memory_space<vmem>>, vector<8x128xf32>
    tpu.vector_store %arg6[%c0_13, %c0_14], %19 {strides = array<i32>} : memref<8x128xf32, #tpu.memory_space<vmem>>, vector<8x128xf32>,
    return
  }
  func.func @transform_0(%arg0: i32) -> (i32, i32) {
    %c0_i32 = arith.constant 0 : i32
    %c0_i32_0 = arith.constant 0 : i32
    return %arg0, %c0_i32 : i32, i32
  }
  func.func @transform_1(%arg0: i32) -> (i32, i32) {
    %c0_i32 = arith.constant 0 : i32
    %c0_i32_0 = arith.constant 0 : i32
    %c0_i32_1 = arith.constant 0 : i32
    return %c0_i32, %c0_i32_0 : i32, i32
  }
  func.func @transform_2(%arg0: i32) -> (i32, i32) {
    %c0_i32 = arith.constant 0 : i32
    %c0_i32_0 = arith.constant 0 : i32
    %c0_i32_1 = arith.constant 0 : i32
    return %c0_i32, %c0_i32_0 : i32, i32
  }
  func.func @transform_3(%arg0: i32) -> (i32, i32) {
    %c0_i32 = arith.constant 0 : i32
    %c0_i32_0 = arith.constant 0 : i32
    return %arg0, %c0_i32 : i32, i32
  }
  func.func @transform_4(%arg0: i32) -> (i32, i32) {
    %c0_i32 = arith.constant 0 : i32
    %c0_i32_0 = arith.constant 0 : i32
    return %arg0, %c0_i32 : i32, i32
  }
  func.func @transform_5(%arg0: i32) -> (i32, i32) {
    %c0_i32 = arith.constant 0 : i32
    %c0_i32_0 = arith.constant 0 : i32
    return %arg0, %c0_i32 : i32, i32
  }
}

module attributes {stable_mosaic.version = 11 : i64} {
  func.func @_bn_relu_kernel(%arg0: i32, %arg1: memref<128x128xf32, #tpu.memory_space<vmem>>, %arg2: memref<1x128xf32, #tpu.memory_space<vmem>>, %arg3: memref<1x128xf32, #tpu.memory_space<vmem>>, %arg4: memref<1x128xf32, #tpu.memory_space<vmem>>, %arg5: memref<1x128xf32, #tpu.memory_space<vmem>>, %arg6: memref<128x128xf32, #tpu.memory_space<vmem>>) attributes {dimension_semantics = [#tpu.dimension_semantics<parallel>], iteration_bounds = array<i64: 1>, scalar_prefetch = 0 : i64, scratch_operands = 0 : i64, tpu.core_type = #tpu.core_type<tc>, window_params = [{transform_indices = @transform_0, window_bounds = array<i64: 128, 128>}, {pipeline_mode = #tpu.pipeline_mode<synchronous>, transform_indices = @transform_1, window_bounds = array<i64: 1, 128>}, {pipeline_mode = #tpu.pipeline_mode<synchronous>, transform_indices = @transform_2, window_bounds = array<i64: 1, 128>}, {pipeline_mode = #tpu.pipeline_mode<synchronous>, transform_indices = @transform_3, window_bounds = array<i64: 1, 128>}, {pipeline_mode = #tpu.pipeline_mode<synchronous>, transform_indices = @transform_4, window_bounds = array<i64: 1, 128>}, {transform_indices = @transform_5, window_bounds = array<i64: 128, 128>}]} {
    %c0 = arith.constant 0 : index
    %c0_0 = arith.constant 0 : index
    %0 = vector.load %arg1[%c0, %c0_0] : memref<128x128xf32, #tpu.memory_space<vmem>>, vector<128x128xf32>
    %c0_1 = arith.constant 0 : index
    %c0_2 = arith.constant 0 : index
    %1 = vector.load %arg2[%c0_1, %c0_2] : memref<1x128xf32, #tpu.memory_space<vmem>>, vector<1x128xf32>
    %2 = vector.broadcast %1 : vector<1x128xf32> to vector<128x128xf32>
    %3 = arith.subf %0, %2 : vector<128x128xf32>
    %c0_3 = arith.constant 0 : index
    %c0_4 = arith.constant 0 : index
    %4 = vector.load %arg3[%c0_3, %c0_4] : memref<1x128xf32, #tpu.memory_space<vmem>>, vector<1x128xf32>
    %5 = vector.broadcast %4 : vector<1x128xf32> to vector<128x128xf32>
    %6 = arith.mulf %3, %5 : vector<128x128xf32>
    %c0_5 = arith.constant 0 : index
    %c0_6 = arith.constant 0 : index
    %7 = vector.load %arg4[%c0_5, %c0_6] : memref<1x128xf32, #tpu.memory_space<vmem>>, vector<1x128xf32>
    %8 = vector.broadcast %7 : vector<1x128xf32> to vector<128x128xf32>
    %9 = arith.mulf %6, %8 : vector<128x128xf32>
    %c0_7 = arith.constant 0 : index
    %c0_8 = arith.constant 0 : index
    %10 = vector.load %arg5[%c0_7, %c0_8] : memref<1x128xf32, #tpu.memory_space<vmem>>, vector<1x128xf32>
    %11 = vector.broadcast %10 : vector<1x128xf32> to vector<128x128xf32>
    %12 = arith.addf %9, %11 : vector<128x128xf32>
    %cst = arith.constant 0.000000e+00 : f32
    %13 = vector.broadcast %cst : f32 to vector<128x128xf32>
    %14 = arith.maximumf %12, %13 : vector<128x128xf32>
    %c0_9 = arith.constant 0 : index
    %c0_10 = arith.constant 0 : index
    %15 = vector.load %arg6[%c0_9, %c0_10] : memref<128x128xf32, #tpu.memory_space<vmem>>, vector<128x128xf32>
    tpu.vector_store %arg6[%c0_9, %c0_10], %14 {strides = array<i32>} : memref<128x128xf32, #tpu.memory_space<vmem>>, vector<128x128xf32>,
    return
  }
  func.func @transform_0(%arg0: i32) -> (i32, i32) {
    %c0_i32 = arith.constant 0 : i32
    %c0_i32_0 = arith.constant 0 : i32
    return %arg0, %c0_i32 : i32, i32
  }
  func.func @transform_1(%arg0: i32) -> (i32, i32) {
    %c0_i32 = arith.constant 0 : i32
    %c0_i32_0 = arith.constant 0 : i32
    %c0_i32_1 = arith.constant 0 : i32
    return %c0_i32, %c0_i32_0 : i32, i32
  }
  func.func @transform_2(%arg0: i32) -> (i32, i32) {
    %c0_i32 = arith.constant 0 : i32
    %c0_i32_0 = arith.constant 0 : i32
    %c0_i32_1 = arith.constant 0 : i32
    return %c0_i32, %c0_i32_0 : i32, i32
  }
  func.func @transform_3(%arg0: i32) -> (i32, i32) {
    %c0_i32 = arith.constant 0 : i32
    %c0_i32_0 = arith.constant 0 : i32
    %c0_i32_1 = arith.constant 0 : i32
    return %c0_i32, %c0_i32_0 : i32, i32
  }
  func.func @transform_4(%arg0: i32) -> (i32, i32) {
    %c0_i32 = arith.constant 0 : i32
    %c0_i32_0 = arith.constant 0 : i32
    %c0_i32_1 = arith.constant 0 : i32
    return %c0_i32, %c0_i32_0 : i32, i32
  }
  func.func @transform_5(%arg0: i32) -> (i32, i32) {
    %c0_i32 = arith.constant 0 : i32
    %c0_i32_0 = arith.constant 0 : i32
    return %arg0, %c0_i32 : i32, i32
  }
}

module attributes {stable_mosaic.version = 11 : i64} {
  func.func @_bn_relu_kernel(%arg0: i32, %arg1: memref<32x128xf32, #tpu.memory_space<vmem>>, %arg2: memref<1x128xf32, #tpu.memory_space<vmem>>, %arg3: memref<1x128xf32, #tpu.memory_space<vmem>>, %arg4: memref<1x128xf32, #tpu.memory_space<vmem>>, %arg5: memref<1x128xf32, #tpu.memory_space<vmem>>, %arg6: memref<32x128xf32, #tpu.memory_space<vmem>>) attributes {dimension_semantics = [#tpu.dimension_semantics<parallel>], iteration_bounds = array<i64: 1>, scalar_prefetch = 0 : i64, scratch_operands = 0 : i64, tpu.core_type = #tpu.core_type<tc>, window_params = [{transform_indices = @transform_0, window_bounds = array<i64: 32, 128>}, {pipeline_mode = #tpu.pipeline_mode<synchronous>, transform_indices = @transform_1, window_bounds = array<i64: 1, 128>}, {pipeline_mode = #tpu.pipeline_mode<synchronous>, transform_indices = @transform_2, window_bounds = array<i64: 1, 128>}, {pipeline_mode = #tpu.pipeline_mode<synchronous>, transform_indices = @transform_3, window_bounds = array<i64: 1, 128>}, {pipeline_mode = #tpu.pipeline_mode<synchronous>, transform_indices = @transform_4, window_bounds = array<i64: 1, 128>}, {transform_indices = @transform_5, window_bounds = array<i64: 32, 128>}]} {
    %c0 = arith.constant 0 : index
    %c0_0 = arith.constant 0 : index
    %0 = vector.load %arg1[%c0, %c0_0] : memref<32x128xf32, #tpu.memory_space<vmem>>, vector<32x128xf32>
    %c0_1 = arith.constant 0 : index
    %c0_2 = arith.constant 0 : index
    %1 = vector.load %arg2[%c0_1, %c0_2] : memref<1x128xf32, #tpu.memory_space<vmem>>, vector<1x128xf32>
    %2 = vector.broadcast %1 : vector<1x128xf32> to vector<32x128xf32>
    %3 = arith.subf %0, %2 : vector<32x128xf32>
    %c0_3 = arith.constant 0 : index
    %c0_4 = arith.constant 0 : index
    %4 = vector.load %arg3[%c0_3, %c0_4] : memref<1x128xf32, #tpu.memory_space<vmem>>, vector<1x128xf32>
    %5 = vector.broadcast %4 : vector<1x128xf32> to vector<32x128xf32>
    %6 = arith.mulf %3, %5 : vector<32x128xf32>
    %c0_5 = arith.constant 0 : index
    %c0_6 = arith.constant 0 : index
    %7 = vector.load %arg4[%c0_5, %c0_6] : memref<1x128xf32, #tpu.memory_space<vmem>>, vector<1x128xf32>
    %8 = vector.broadcast %7 : vector<1x128xf32> to vector<32x128xf32>
    %9 = arith.mulf %6, %8 : vector<32x128xf32>
    %c0_7 = arith.constant 0 : index
    %c0_8 = arith.constant 0 : index
    %10 = vector.load %arg5[%c0_7, %c0_8] : memref<1x128xf32, #tpu.memory_space<vmem>>, vector<1x128xf32>
    %11 = vector.broadcast %10 : vector<1x128xf32> to vector<32x128xf32>
    %12 = arith.addf %9, %11 : vector<32x128xf32>
    %cst = arith.constant 0.000000e+00 : f32
    %13 = vector.broadcast %cst : f32 to vector<32x128xf32>
    %14 = arith.maximumf %12, %13 : vector<32x128xf32>
    %c0_9 = arith.constant 0 : index
    %c0_10 = arith.constant 0 : index
    %15 = vector.load %arg6[%c0_9, %c0_10] : memref<32x128xf32, #tpu.memory_space<vmem>>, vector<32x128xf32>
    tpu.vector_store %arg6[%c0_9, %c0_10], %14 {strides = array<i32>} : memref<32x128xf32, #tpu.memory_space<vmem>>, vector<32x128xf32>,
    return
  }
  func.func @transform_0(%arg0: i32) -> (i32, i32) {
    %c0_i32 = arith.constant 0 : i32
    %c0_i32_0 = arith.constant 0 : i32
    return %arg0, %c0_i32 : i32, i32
  }
  func.func @transform_1(%arg0: i32) -> (i32, i32) {
    %c0_i32 = arith.constant 0 : i32
    %c0_i32_0 = arith.constant 0 : i32
    %c0_i32_1 = arith.constant 0 : i32
    return %c0_i32, %c0_i32_0 : i32, i32
  }
  func.func @transform_2(%arg0: i32) -> (i32, i32) {
    %c0_i32 = arith.constant 0 : i32
    %c0_i32_0 = arith.constant 0 : i32
    %c0_i32_1 = arith.constant 0 : i32
    return %c0_i32, %c0_i32_0 : i32, i32
  }
  func.func @transform_3(%arg0: i32) -> (i32, i32) {
    %c0_i32 = arith.constant 0 : i32
    %c0_i32_0 = arith.constant 0 : i32
    %c0_i32_1 = arith.constant 0 : i32
    return %c0_i32, %c0_i32_0 : i32, i32
  }
  func.func @transform_4(%arg0: i32) -> (i32, i32) {
    %c0_i32 = arith.constant 0 : i32
    %c0_i32_0 = arith.constant 0 : i32
    %c0_i32_1 = arith.constant 0 : i32
    return %c0_i32, %c0_i32_0 : i32, i32
  }
  func.func @transform_5(%arg0: i32) -> (i32, i32) {
    %c0_i32 = arith.constant 0 : i32
    %c0_i32_0 = arith.constant 0 : i32
    return %arg0, %c0_i32 : i32, i32
  }
}

module attributes {stable_mosaic.version = 11 : i64} {
  func.func @_gemm_stats_kernel(%arg0: i32, %arg1: memref<32x144xbf16, #tpu.memory_space<vmem>>, %arg2: memref<144x128xbf16, #tpu.memory_space<vmem>>, %arg3: memref<1x128xf32, #tpu.memory_space<vmem>>, %arg4: memref<32x128xf32, #tpu.memory_space<vmem>>, %arg5: memref<8x128xf32, #tpu.memory_space<vmem>>, %arg6: memref<8x128xf32, #tpu.memory_space<vmem>>) attributes {dimension_semantics = [#tpu.dimension_semantics<parallel>], iteration_bounds = array<i64: 1>, scalar_prefetch = 0 : i64, scratch_operands = 0 : i64, tpu.core_type = #tpu.core_type<tc>, window_params = [{transform_indices = @transform_0, window_bounds = array<i64: 32, 144>}, {pipeline_mode = #tpu.pipeline_mode<synchronous>, transform_indices = @transform_1, window_bounds = array<i64: 144, 128>}, {pipeline_mode = #tpu.pipeline_mode<synchronous>, transform_indices = @transform_2, window_bounds = array<i64: 1, 128>}, {transform_indices = @transform_3, window_bounds = array<i64: 32, 128>}, {transform_indices = @transform_4, window_bounds = array<i64: 8, 128>}, {transform_indices = @transform_5, window_bounds = array<i64: 8, 128>}]} {
    %c0 = arith.constant 0 : index
    %c0_0 = arith.constant 0 : index
    %0 = vector.load %arg1[%c0, %c0_0] : memref<32x144xbf16, #tpu.memory_space<vmem>>, vector<32x144xbf16>
    %c0_1 = arith.constant 0 : index
    %c0_2 = arith.constant 0 : index
    %1 = vector.load %arg2[%c0_1, %c0_2] : memref<144x128xbf16, #tpu.memory_space<vmem>>, vector<144x128xbf16>
    %cst = arith.constant dense<0.000000e+00> : vector<32x128xf32>
    %2 = tpu.matmul %0, %1, %cst {dimension_numbers = #tpu.dot_dimension_numbers<[1], [0], [0], [1], [0, 0, 1, 1], [], []>} : vector<32x144xbf16>, vector<144x128xbf16>, vector<32x128xf32> -> vector<32x128xf32>
    %c0_3 = arith.constant 0 : index
    %c0_4 = arith.constant 0 : index
    %3 = vector.load %arg3[%c0_3, %c0_4] : memref<1x128xf32, #tpu.memory_space<vmem>>, vector<1x128xf32>
    %4 = vector.broadcast %3 : vector<1x128xf32> to vector<32x128xf32>
    %5 = arith.addf %2, %4 : vector<32x128xf32>
    %c0_5 = arith.constant 0 : index
    %c0_6 = arith.constant 0 : index
    %6 = vector.load %arg4[%c0_5, %c0_6] : memref<32x128xf32, #tpu.memory_space<vmem>>, vector<32x128xf32>
    tpu.vector_store %arg4[%c0_5, %c0_6], %5 {strides = array<i32>} : memref<32x128xf32, #tpu.memory_space<vmem>>, vector<32x128xf32>,
    %7 = tpu.iota {dimensions = array<i32: 0>} : vector<32x128xi32>
    %c32_i32 = arith.constant 32 : i32
    %8 = arith.muli %arg0, %c32_i32 : i32
    %9 = vector.broadcast %8 : i32 to vector<32x128xi32>
    %10 = arith.addi %7, %9 : vector<32x128xi32>
    %c32_i32_7 = arith.constant 32 : i32
    %11 = vector.broadcast %c32_i32_7 : i32 to vector<32x128xi32>
    %12 = arith.cmpi slt, %10, %11 : vector<32x128xi32>
    %cst_8 = arith.constant 0.000000e+00 : f32
    %13 = vector.broadcast %cst_8 : f32 to vector<32x128xf32>
    %14 = arith.select %12, %5, %13 : vector<32x128xi1>, vector<32x128xf32>
    %15 = vector.shape_cast %14 : vector<32x128xf32> to vector<4x8x128xf32>
    %cst_9 = arith.constant dense<0.000000e+00> : vector<8x128xf32>
    %16 = vector.multi_reduction <add>, %15, %cst_9 [0] : vector<4x8x128xf32> to vector<8x128xf32>
    %c0_10 = arith.constant 0 : index
    %c0_11 = arith.constant 0 : index
    %17 = vector.load %arg5[%c0_10, %c0_11] : memref<8x128xf32, #tpu.memory_space<vmem>>, vector<8x128xf32>
    tpu.vector_store %arg5[%c0_10, %c0_11], %16 {strides = array<i32>} : memref<8x128xf32, #tpu.memory_space<vmem>>, vector<8x128xf32>,
    %18 = arith.mulf %15, %15 : vector<4x8x128xf32>
    %cst_12 = arith.constant dense<0.000000e+00> : vector<8x128xf32>
    %19 = vector.multi_reduction <add>, %18, %cst_12 [0] : vector<4x8x128xf32> to vector<8x128xf32>
    %c0_13 = arith.constant 0 : index
    %c0_14 = arith.constant 0 : index
    %20 = vector.load %arg6[%c0_13, %c0_14] : memref<8x128xf32, #tpu.memory_space<vmem>>, vector<8x128xf32>
    tpu.vector_store %arg6[%c0_13, %c0_14], %19 {strides = array<i32>} : memref<8x128xf32, #tpu.memory_space<vmem>>, vector<8x128xf32>,
    return
  }
  func.func @transform_0(%arg0: i32) -> (i32, i32) {
    %c0_i32 = arith.constant 0 : i32
    %c0_i32_0 = arith.constant 0 : i32
    return %arg0, %c0_i32 : i32, i32
  }
  func.func @transform_1(%arg0: i32) -> (i32, i32) {
    %c0_i32 = arith.constant 0 : i32
    %c0_i32_0 = arith.constant 0 : i32
    %c0_i32_1 = arith.constant 0 : i32
    return %c0_i32, %c0_i32_0 : i32, i32
  }
  func.func @transform_2(%arg0: i32) -> (i32, i32) {
    %c0_i32 = arith.constant 0 : i32
    %c0_i32_0 = arith.constant 0 : i32
    %c0_i32_1 = arith.constant 0 : i32
    return %c0_i32, %c0_i32_0 : i32, i32
  }
  func.func @transform_3(%arg0: i32) -> (i32, i32) {
    %c0_i32 = arith.constant 0 : i32
    %c0_i32_0 = arith.constant 0 : i32
    return %arg0, %c0_i32 : i32, i32
  }
  func.func @transform_4(%arg0: i32) -> (i32, i32) {
    %c0_i32 = arith.constant 0 : i32
    %c0_i32_0 = arith.constant 0 : i32
    return %arg0, %c0_i32 : i32, i32
  }
  func.func @transform_5(%arg0: i32) -> (i32, i32) {
    %c0_i32 = arith.constant 0 : i32
    %c0_i32_0 = arith.constant 0 : i32
    return %arg0, %c0_i32 : i32, i32
  }
}

</mosaic_0001>

<llo_original>
// kernel: patch_embedding_forward.5
$region0: #{patch_embedding_forward.5}
  #allocation0 [shape = 'u32[]', space=smem, size = 0x4, offset = 0x4, fixed_abs, tag = 'smem constant byte address 0x4 - core index']
  #allocation1 [shape = 'u32[144,128]{1,0:T(1,128)}', space=vmem, size = 0x12000, scoped, tag = 'internal scratch']
  %s0 = inlined_call_operand.vmem [shape: f32[128,128], index: 0, kind: input, shape index: {}, may-alias: {0,5}]
  %s1 = inlined_call_operand.vmem [shape: f32[1,128], index: 1, kind: input, shape index: {}]
  %s2 = inlined_call_operand.vmem [shape: f32[1,128], index: 2, kind: input, shape index: {}]
  %s3 = inlined_call_operand.vmem [shape: f32[1,128], index: 3, kind: input, shape index: {}]
  %s4 = inlined_call_operand.vmem [shape: f32[1,128], index: 4, kind: input, shape index: {}]
  %s5 = inlined_call_operand.vmem [shape: f32[128,128], index: 5, kind: output, shape index: {}, may-alias: {0,5}]
  %s6 = sld [smem:[#allocation0]]
  $region30: #{patch_embedding_forward.5} parent=0
    _
  %s8 = ssub.s32 1, %s6
  %s9 = scalar_select 0, %s8, %s6
  // Predicated region
  $region2: #{patch_embedding_forward.5} parent=0 // pred_check
    _
  $region3: #{patch_embedding_forward.5} parent=0 // pred_check_branch
    %11 = sbr.rel (0) target = $region5
  $region4: #{patch_embedding_forward.5} parent=0 // pred_region
    _
  $region5: #{patch_embedding_forward.5} parent=0 // pred_fallthru
    _
  // Predicated region
  $region6: #{patch_embedding_forward.5} parent=0 // pred_check
    _
  $region7: #{patch_embedding_forward.5} parent=0 // pred_check_branch
    %13 = sbr.rel (0) target = $region9
  $region8: #{patch_embedding_forward.5} parent=0 // pred_region
    _
  $region9: #{patch_embedding_forward.5} parent=0 // pred_fallthru
    _
  // Predicated region
  $region10: #{patch_embedding_forward.5} parent=0 // pred_check
    _
  $region11: #{patch_embedding_forward.5} parent=0 // pred_check_branch
    %15 = sbr.rel (0) target = $region13
  $region12: #{patch_embedding_forward.5} parent=0 // pred_region
    _
  $region13: #{patch_embedding_forward.5} parent=0 // pred_fallthru
    _
  // Predicated region
  $region14: #{patch_embedding_forward.5} parent=0 // pred_check
    _
  $region15: #{patch_embedding_forward.5} parent=0 // pred_check_branch
    %17 = sbr.rel (0) target = $region17
  $region16: #{patch_embedding_forward.5} parent=0 // pred_region
    _
  $region17: #{patch_embedding_forward.5} parent=0 // pred_fallthru
    _
  // Predicated region
  $region18: #{patch_embedding_forward.5} parent=0 // pred_check
    _
  $region19: #{patch_embedding_forward.5} parent=0 // pred_check_branch
    %19 = sbr.rel (0) target = $region21
  $region20: #{patch_embedding_forward.5} parent=0 // pred_region
    _
  $region21: #{patch_embedding_forward.5} parent=0 // pred_fallthru
    _
  %v20 = vld [vmem:[%s0] sm:$0xff]
  %v21 = vld [vmem:[%s0 + $0x8] sm:$0xff]
  %v22 = vld [vmem:[%s0 + $0x10] sm:$0xff]
  %v23 = vld [vmem:[%s0 + $0x18] sm:$0xff]
  %v24 = vld [vmem:[%s0 + $0x20] sm:$0xff]
  %v25 = vld [vmem:[%s0 + $0x28] sm:$0xff]
  %v26 = vld [vmem:[%s0 + $0x30] sm:$0xff]
  %v27 = vld [vmem:[%s0 + $0x38] sm:$0xff]
  %v28 = vld [vmem:[%s0 + $0x40] sm:$0xff]
  %v29 = vld [vmem:[%s0 + $0x48] sm:$0xff]
  %v30 = vld [vmem:[%s0 + $0x50] sm:$0xff]
  %v31 = vld [vmem:[%s0 + $0x58] sm:$0xff]
  %v32 = vld [vmem:[%s0 + $0x60] sm:$0xff]
  %v33 = vld [vmem:[%s0 + $0x68] sm:$0xff]
  %v34 = vld [vmem:[%s0 + $0x70] sm:$0xff]
  %v35 = vld [vmem:[%s0 + $0x78] sm:$0xff]
  %v36 = vld [vmem:[%s1] sm:$0x1]
  %v38 = vlaneseq
  %v39 = vshrl.u32 %v38, 7
  %v40 = vsub.s32 0, %v39
  %v41 = vrot.slane %v36, %v40
  %v43 = vsub.f32 %v20, %v41
  %v44 = vsub.f32 %v21, %v41
  %v45 = vsub.f32 %v22, %v41
  %v46 = vsub.f32 %v23, %v41
  %v47 = vsub.f32 %v24, %v41
  %v48 = vsub.f32 %v25, %v41
  %v49 = vsub.f32 %v26, %v41
  %v50 = vsub.f32 %v27, %v41
  %v51 = vsub.f32 %v28, %v41
  %v52 = vsub.f32 %v29, %v41
  %v53 = vsub.f32 %v30, %v41
  %v54 = vsub.f32 %v31, %v41
  %v55 = vsub.f32 %v32, %v41
  %v56 = vsub.f32 %v33, %v41
  %v57 = vsub.f32 %v34, %v41
  %v58 = vsub.f32 %v35, %v41
  %v59 = vld [vmem:[%s2] sm:$0x1]
  %v61 = vlaneseq
  %v62 = vshrl.u32 %v61, 7
  %v63 = vsub.s32 0, %v62
  %v64 = vrot.slane %v59, %v63
  %v66 = vmul.f32 %v43, %v64
  %v67 = vmul.f32 %v44, %v64
  %v68 = vmul.f32 %v45, %v64
  %v69 = vmul.f32 %v46, %v64
  %v70 = vmul.f32 %v47, %v64
  %v71 = vmul.f32 %v48, %v64
  %v72 = vmul.f32 %v49, %v64
  %v73 = vmul.f32 %v50, %v64
  %v74 = vmul.f32 %v51, %v64
  %v75 = vmul.f32 %v52, %v64
  %v76 = vmul.f32 %v53, %v64
  %v77 = vmul.f32 %v54, %v64
  %v78 = vmul.f32 %v55, %v64
  %v79 = vmul.f32 %v56, %v64
  %v80 = vmul.f32 %v57, %v64
  %v81 = vmul.f32 %v58, %v64
  %v82 = vld [vmem:[%s3] sm:$0x1]
  %v84 = vlaneseq
  %v85 = vshrl.u32 %v84, 7
  %v86 = vsub.s32 0, %v85
  %v87 = vrot.slane %v82, %v86
  %v89 = vmul.f32 %v66, %v87
  %v90 = vmul.f32 %v67, %v87
  %v91 = vmul.f32 %v68, %v87
  %v92 = vmul.f32 %v69, %v87
  %v93 = vmul.f32 %v70, %v87
  %v94 = vmul.f32 %v71, %v87
  %v95 = vmul.f32 %v72, %v87
  %v96 = vmul.f32 %v73, %v87
  %v97 = vmul.f32 %v74, %v87
  %v98 = vmul.f32 %v75, %v87
  %v99 = vmul.f32 %v76, %v87
  %v100 = vmul.f32 %v77, %v87
  %v101 = vmul.f32 %v78, %v87
  %v102 = vmul.f32 %v79, %v87
  %v103 = vmul.f32 %v80, %v87
  %v104 = vmul.f32 %v81, %v87
  %v105 = vld [vmem:[%s4] sm:$0x1]
  %v107 = vlaneseq
  %v108 = vshrl.u32 %v107, 7
  %v109 = vsub.s32 0, %v108
  %v110 = vrot.slane %v105, %v109
  %v112 = vadd.f32 %v89, %v110
  %v113 = vadd.f32 %v90, %v110
  %v114 = vadd.f32 %v91, %v110
  %v115 = vadd.f32 %v92, %v110
  %v116 = vadd.f32 %v93, %v110
  %v117 = vadd.f32 %v94, %v110
  %v118 = vadd.f32 %v95, %v110
  %v119 = vadd.f32 %v96, %v110
  %v120 = vadd.f32 %v97, %v110
  %v121 = vadd.f32 %v98, %v110
  %v122 = vadd.f32 %v99, %v110
  %v123 = vadd.f32 %v100, %v110
  %v124 = vadd.f32 %v101, %v110
  %v125 = vadd.f32 %v102, %v110
  %v126 = vadd.f32 %v103, %v110
  %v127 = vadd.f32 %v104, %v110
  %v128 = vmax.f32 %v112, 0.0
  %v129 = vmax.f32 %v113, 0.0
  %v130 = vmax.f32 %v114, 0.0
  %v131 = vmax.f32 %v115, 0.0
  %v132 = vmax.f32 %v116, 0.0
  %v133 = vmax.f32 %v117, 0.0
  %v134 = vmax.f32 %v118, 0.0
  %v135 = vmax.f32 %v119, 0.0
  %v136 = vmax.f32 %v120, 0.0
  %v137 = vmax.f32 %v121, 0.0
  %v138 = vmax.f32 %v122, 0.0
  %v139 = vmax.f32 %v123, 0.0
  %v140 = vmax.f32 %v124, 0.0
  %v141 = vmax.f32 %v125, 0.0
  %v142 = vmax.f32 %v126, 0.0
  %v143 = vmax.f32 %v127, 0.0
  %144 = vst [vmem:[%s5] sm:$0xff] %v128
  %145 = vst [vmem:[%s5 + $0x8] sm:$0xff] %v129
  %146 = vst [vmem:[%s5 + $0x10] sm:$0xff] %v130
  %147 = vst [vmem:[%s5 + $0x18] sm:$0xff] %v131
  %148 = vst [vmem:[%s5 + $0x20] sm:$0xff] %v132
  %149 = vst [vmem:[%s5 + $0x28] sm:$0xff] %v133
  %150 = vst [vmem:[%s5 + $0x30] sm:$0xff] %v134
  %151 = vst [vmem:[%s5 + $0x38] sm:$0xff] %v135
  %152 = vst [vmem:[%s5 + $0x40] sm:$0xff] %v136
  %153 = vst [vmem:[%s5 + $0x48] sm:$0xff] %v137
  %154 = vst [vmem:[%s5 + $0x50] sm:$0xff] %v138
  %155 = vst [vmem:[%s5 + $0x58] sm:$0xff] %v139
  %156 = vst [vmem:[%s5 + $0x60] sm:$0xff] %v140
  %157 = vst [vmem:[%s5 + $0x68] sm:$0xff] %v141
  %158 = vst [vmem:[%s5 + $0x70] sm:$0xff] %v142
  %159 = vst [vmem:[%s5 + $0x78] sm:$0xff] %v143
  // Predicated region
  $region22: #{patch_embedding_forward.5} parent=0 // pred_check
    _
  $region23: #{patch_embedding_forward.5} parent=0 // pred_check_branch
    %161 = sbr.rel (0) target = $region25
  $region24: #{patch_embedding_forward.5} parent=0 // pred_region
    _
  $region25: #{patch_embedding_forward.5} parent=0 // pred_fallthru
    _
  // Predicated region
  $region26: #{patch_embedding_forward.5} parent=0 // pred_check
    _
  $region27: #{patch_embedding_forward.5} parent=0 // pred_check_branch
    %163 = sbr.rel (0) target = $region29
  $region28: #{patch_embedding_forward.5} parent=0 // pred_region
    _
  $region29: #{patch_embedding_forward.5} parent=0 // pred_fallthru
    _

// kernel: patch_embedding_forward.4
$region0: #{patch_embedding_forward.4}
  #allocation0 [shape = 'u32[]', space=smem, size = 0x4, offset = 0x4, fixed_abs, tag = 'smem constant byte address 0x4 - core index']
  #allocation1 [shape = 'u32[144,128]{1,0:T(1,128)}', space=vmem, size = 0x12000, scoped, tag = 'internal scratch']
  %s0 = inlined_call_operand.vmem [shape: bf16[128,40], index: 0, kind: input, shape index: {}]
  %s1 = inlined_call_operand.vmem [shape: bf16[40,128], index: 1, kind: input, shape index: {}]
  %s2 = inlined_call_operand.vmem [shape: f32[1,128], index: 2, kind: input, shape index: {}]
  %s3 = inlined_call_operand.vmem [shape: f32[128,128], index: 3, kind: output, shape index: {0}]
  %s4 = inlined_call_operand.vmem [shape: f32[8,128], index: 4, kind: output, shape index: {1}]
  %s5 = inlined_call_operand.vmem [shape: f32[8,128], index: 5, kind: output, shape index: {2}]
  %6 = xla_tuple %s3, %s4, %s5
  %s7 = sld [smem:[#allocation0]]
  $region38: #{patch_embedding_forward.4} parent=0
    _
  %s9 = ssub.s32 1, %s7
  %s10 = scalar_select 0, %s9, %s7
  // Predicated region
  $region2: #{patch_embedding_forward.4} parent=0 // pred_check
    _
  $region3: #{patch_embedding_forward.4} parent=0 // pred_check_branch
    %12 = sbr.rel (0) target = $region5
  $region4: #{patch_embedding_forward.4} parent=0 // pred_region
    _
  $region5: #{patch_embedding_forward.4} parent=0 // pred_fallthru
    _
  // Predicated region
  $region6: #{patch_embedding_forward.4} parent=0 // pred_check
    _
  $region7: #{patch_embedding_forward.4} parent=0 // pred_check_branch
    %14 = sbr.rel (0) target = $region9
  $region8: #{patch_embedding_forward.4} parent=0 // pred_region
    _
  $region9: #{patch_embedding_forward.4} parent=0 // pred_fallthru
    _
  // Predicated region
  $region10: #{patch_embedding_forward.4} parent=0 // pred_check
    _
  $region11: #{patch_embedding_forward.4} parent=0 // pred_check_branch
    %16 = sbr.rel (0) target = $region13
  $region12: #{patch_embedding_forward.4} parent=0 // pred_region
    _
  $region13: #{patch_embedding_forward.4} parent=0 // pred_fallthru
    _
  %v18 = vld [vmem:[%s0] sm:$0xf]
  %v19 = vld [vmem:[%s0 + $0x4] sm:$0xf]
  %v20 = vld [vmem:[%s0 + $0x8] sm:$0xf]
  %v21 = vld [vmem:[%s0 + $0xc] sm:$0xf]
  %v22 = vld [vmem:[%s0 + $0x10] sm:$0xf]
  %v23 = vld [vmem:[%s0 + $0x14] sm:$0xf]
  %v24 = vld [vmem:[%s0 + $0x18] sm:$0xf]
  %v25 = vld [vmem:[%s0 + $0x1c] sm:$0xf]
  %v26 = vld [vmem:[%s0 + $0x20] sm:$0xf]
  %v27 = vld [vmem:[%s0 + $0x24] sm:$0xf]
  %v28 = vld [vmem:[%s0 + $0x28] sm:$0xf]
  %v29 = vld [vmem:[%s0 + $0x2c] sm:$0xf]
  %v30 = vld [vmem:[%s0 + $0x30] sm:$0xf]
  %v31 = vld [vmem:[%s0 + $0x34] sm:$0xf]
  %v32 = vld [vmem:[%s0 + $0x38] sm:$0xf]
  %v33 = vld [vmem:[%s0 + $0x3c] sm:$0xf]
  %v34 = vld [vmem:[%s1] sm:$0xf]
  %v35 = vld [vmem:[%s1 + $0x4] sm:$0xf]
  %v36 = vld [vmem:[%s1 + $0x8] sm:$0xf]
  %v37 = vld [vmem:[%s1 + $0xc] sm:$0xf]
  %v38 = vld [vmem:[%s1 + $0x10] sm:$0xf]
  %v39 = vld [vmem:[%s2] sm:$0x1]
  %v41 = vlaneseq
  %v42 = vshrl.u32 %v41, 7
  %v43 = vsub.s32 0, %v42
  %v44 = vrot.slane %v39, %v43
  %v62 = vunpack.c.l.b16 %v18
  %v63 = vunpack.c.l.b16 %v19
  %v64 = vunpack.c.l.b16 %v20
  %v65 = vunpack.c.l.b16 %v21
  %v66 = vunpack.c.l.b16 %v22
  %v67 = vunpack.c.l.b16 %v23
  %v68 = vunpack.c.l.b16 %v24
  %v69 = vunpack.c.l.b16 %v25
  %v70 = vunpack.c.l.b16 %v26
  %v71 = vunpack.c.l.b16 %v27
  %v72 = vunpack.c.l.b16 %v28
  %v73 = vunpack.c.l.b16 %v29
  %v74 = vunpack.c.l.b16 %v30
  %v75 = vunpack.c.l.b16 %v31
  %v76 = vunpack.c.l.b16 %v32
  %v77 = vunpack.c.l.b16 %v33
  %v78 = vpack.c.b16 %v63, %v62
  %v79 = vpack.c.b16 %v65, %v64
  %v80 = vpack.c.b16 %v67, %v66
  %v81 = vpack.c.b16 %v69, %v68
  %v82 = vpack.c.b16 %v71, %v70
  %v83 = vpack.c.b16 %v73, %v72
  %v84 = vpack.c.b16 %v75, %v74
  %v85 = vpack.c.b16 %v77, %v76
  %v91 = vunpack.c.l.b16 %v34
  %v92 = vunpack.c.l.b16 %v35
  %v93 = vunpack.c.l.b16 %v36
  %v94 = vunpack.c.l.b16 %v37
  %v95 = vunpack.c.l.b16 %v38
  %v96 = vpack.c.b16 %v92, %v91
  %v97 = vpack.c.b16 %v94, %v93
  %v98 = vpack.c.b16 %v95, %v95
  %vm101 = vcmask 326656
  %v103 = vsel %vm101, %v78, 0
  %v106 = vsel %vm101, %v79, 0
  %v109 = vsel %vm101, %v80, 0
  %v112 = vsel %vm101, %v81, 0
  %v115 = vsel %vm101, %v82, 0
  %v118 = vsel %vm101, %v83, 0
  %v121 = vsel %vm101, %v84, 0
  %v124 = vsel %vm101, %v85, 0
  %vm126 = vcmask 1043456
  %v128 = vsel %vm126, %v98, 0
  %130 = vmatprep.subr.bf16.mxu0 0
  %131 = vmatpush1.bf16.msra.mxu0 %v96
  %132 = vmatprep.subr.bf16.mxu0 0
  %133 = vmatpush1.bf16.msra.mxu0 %v97
  %134 = vmatprep.subr.bf16.mxu0 0
  %135 = vmatpush1.bf16.msra.mxu0 %v128
  %136 = vmatprep.subr.bf16.mxu0 0
  %137 = vmatpush1.bf16.msra.mxu0 0
  %138 = vmatprep.subr.bf16.mxu0 0
  %139 = vmatpush1.bf16.msra.mxu0 0
  %140 = vmatprep.subr.bf16.mxu0 0
  %141 = vmatpush1.bf16.msra.mxu0 0
  %142 = vmatprep.subr.bf16.mxu0 0
  %143 = vmatpush1.bf16.msra.mxu0 0
  %144 = vmatprep.subr.bf16.mxu0 0
  %145 = vmatpush1.bf16.msra.mxu0 0
  %146 = vmatprep.subr.bf16.mxu0 0
  %147 = vmatpush1.bf16.msra.mxu0 0
  %148 = vmatprep.subr.bf16.mxu0 0
  %149 = vmatpush1.bf16.msra.mxu0 0
  %150 = vmatprep.subr.bf16.mxu0 0
  %151 = vmatpush1.bf16.msra.mxu0 0
  %152 = vmatprep.subr.bf16.mxu0 0
  %153 = vmatpush1.bf16.msra.mxu0 0
  %154 = vmatprep.subr.bf16.mxu0 0
  %155 = vmatpush1.bf16.msra.mxu0 0
  %156 = vmatprep.subr.bf16.mxu0 0
  %157 = vmatpush1.bf16.msra.mxu0 0
  %158 = vmatprep.subr.bf16.mxu0 0
  %159 = vmatpush1.bf16.msra.mxu0 0
  %160 = vmatprep.subr.bf16.mxu0 0
  %161 = vmatpush1.bf16.msra.mxu0 0
  %162 = vmatprep.mubr.bf16.mxu0 0
  %163 = vmatmul.mubr.bf16.gmra.mrb[0].mxu0 %v103
  %v164 = vpop.f32.mrb[0].mxu0
  %v165 = vadd.f32 %v44, %v164
  %v166 = vpop.f32.mrb[0].mxu0
  %v167 = vpop.f32.mrb[0].mxu0
  %v168 = vadd.f32 %v44, %v167
  %v169 = vpop.f32.mrb[0].mxu0
  %170 = vmatprep.mubr.bf16.mxu0 0
  %171 = vmatmul.mubr.bf16.gmra.mrb[0].mxu0 %v106
  %v172 = vpop.f32.mrb[0].mxu0
  %v173 = vadd.f32 %v44, %v172
  %v174 = vpop.f32.mrb[0].mxu0
  %v175 = vpop.f32.mrb[0].mxu0
  %v176 = vadd.f32 %v44, %v175
  %v177 = vpop.f32.mrb[0].mxu0
  %178 = vmatprep.mubr.bf16.mxu0 0
  %179 = vmatmul.mubr.bf16.gmra.mrb[0].mxu0 %v109
  %v180 = vpop.f32.mrb[0].mxu0
  %v181 = vadd.f32 %v44, %v180
  %v182 = vpop.f32.mrb[0].mxu0
  %v183 = vpop.f32.mrb[0].mxu0
  %v184 = vadd.f32 %v44, %v183
  %v185 = vpop.f32.mrb[0].mxu0
  %186 = vmatprep.mubr.bf16.mxu0 0
  %187 = vmatmul.mubr.bf16.gmra.mrb[0].mxu0 %v112
  %v188 = vpop.f32.mrb[0].mxu0
  %v189 = vadd.f32 %v44, %v188
  %v190 = vpop.f32.mrb[0].mxu0
  %v191 = vpop.f32.mrb[0].mxu0
  %v192 = vadd.f32 %v44, %v191
  %v193 = vpop.f32.mrb[0].mxu0
  %194 = vmatprep.mubr.bf16.mxu0 0
  %195 = vmatmul.mubr.bf16.gmra.mrb[0].mxu0 %v115
  %v196 = vpop.f32.mrb[0].mxu0
  %v197 = vadd.f32 %v44, %v196
  %v198 = vpop.f32.mrb[0].mxu0
  %v199 = vpop.f32.mrb[0].mxu0
  %v200 = vadd.f32 %v44, %v199
  %v201 = vpop.f32.mrb[0].mxu0
  %202 = vmatprep.mubr.bf16.mxu0 0
  %203 = vmatmul.mubr.bf16.gmra.mrb[0].mxu0 %v118
  %v204 = vpop.f32.mrb[0].mxu0
  %v205 = vadd.f32 %v44, %v204
  %v206 = vpop.f32.mrb[0].mxu0
  %v207 = vpop.f32.mrb[0].mxu0
  %v208 = vadd.f32 %v44, %v207
  %v209 = vpop.f32.mrb[0].mxu0
  %210 = vmatprep.mubr.bf16.mxu0 0
  %211 = vmatmul.mubr.bf16.gmra.mrb[0].mxu0 %v121
  %v212 = vpop.f32.mrb[0].mxu0
  %v213 = vadd.f32 %v44, %v212
  %v214 = vpop.f32.mrb[0].mxu0
  %v215 = vpop.f32.mrb[0].mxu0
  %v216 = vadd.f32 %v44, %v215
  %v217 = vpop.f32.mrb[0].mxu0
  %218 = vmatprep.mubr.bf16.mxu0 0
  %219 = vmatmul.mubr.bf16.gmra.mrb[0].mxu0 %v124
  %v220 = vpop.f32.mrb[0].mxu0
  %v221 = vadd.f32 %v44, %v220
  %v222 = vpop.f32.mrb[0].mxu0
  %v223 = vpop.f32.mrb[0].mxu0
  %v224 = vadd.f32 %v44, %v223
  %v225 = vpop.f32.mrb[0].mxu0
  %226 = vdwg.mxu0
  %227 = vst [vmem:[%s3] sm:$0xff] %v165
  %228 = vst [vmem:[%s3 + $0x8] sm:$0xff] %v168
  %229 = vst [vmem:[%s3 + $0x10] sm:$0xff] %v173
  %230 = vst [vmem:[%s3 + $0x18] sm:$0xff] %v176
  %231 = vst [vmem:[%s3 + $0x20] sm:$0xff] %v181
  %232 = vst [vmem:[%s3 + $0x28] sm:$0xff] %v184
  %233 = vst [vmem:[%s3 + $0x30] sm:$0xff] %v189
  %234 = vst [vmem:[%s3 + $0x38] sm:$0xff] %v192
  %235 = vst [vmem:[%s3 + $0x40] sm:$0xff] %v197
  %236 = vst [vmem:[%s3 + $0x48] sm:$0xff] %v200
  %237 = vst [vmem:[%s3 + $0x50] sm:$0xff] %v205
  %238 = vst [vmem:[%s3 + $0x58] sm:$0xff] %v208
  %239 = vst [vmem:[%s3 + $0x60] sm:$0xff] %v213
  %240 = vst [vmem:[%s3 + $0x68] sm:$0xff] %v216
  %241 = vst [vmem:[%s3 + $0x70] sm:$0xff] %v221
  %242 = vst [vmem:[%s3 + $0x78] sm:$0xff] %v224
  %v243 = vlaneseq
  %v244 = vshrl.u32 %v243, 7
  %v245 = vadd.s32 %v244, 8
  %v246 = vadd.s32 %v244, 16
  %v247 = vadd.s32 %v244, 24
  %v248 = vadd.s32 %v244, 32
  %v249 = vadd.s32 %v244, 40
  %v250 = vadd.s32 %v244, 48
  %v251 = vadd.s32 %v244, 56
  %v252 = vadd.s32 %v244, 64
  %v253 = vadd.s32 %v244, 72
  %v254 = vadd.s32 %v244, 80
  %v255 = vadd.s32 %v244, 88
  %v256 = vadd.s32 %v244, 96
  %v257 = vadd.s32 %v244, 104
  %v258 = vadd.s32 %v244, 112
  %v259 = vadd.s32 %v244, 120
  %s260 = smul.u32 0, 128
  %v261 = vstv %s260
  %v262 = vadd.s32 %v244, %v261
  %v263 = vadd.s32 %v245, %v261
  %v264 = vadd.s32 %v246, %v261
  %v265 = vadd.s32 %v247, %v261
  %v266 = vadd.s32 %v248, %v261
  %v267 = vadd.s32 %v249, %v261
  %v268 = vadd.s32 %v250, %v261
  %v269 = vadd.s32 %v251, %v261
  %v270 = vadd.s32 %v252, %v261
  %v271 = vadd.s32 %v253, %v261
  %v272 = vadd.s32 %v254, %v261
  %v273 = vadd.s32 %v255, %v261
  %v274 = vadd.s32 %v256, %v261
  %v275 = vadd.s32 %v257, %v261
  %v276 = vadd.s32 %v258, %v261
  %v277 = vadd.s32 %v259, %v261
  %vm278 = vcmp.lt.s32.totalorder %v262, 128
  %vm279 = vcmp.lt.s32.totalorder %v263, 128
  %vm280 = vcmp.lt.s32.totalorder %v264, 128
  %vm281 = vcmp.lt.s32.totalorder %v265, 128
  %vm282 = vcmp.lt.s32.totalorder %v266, 128
  %vm283 = vcmp.lt.s32.totalorder %v267, 128
  %vm284 = vcmp.lt.s32.totalorder %v268, 128
  %vm285 = vcmp.lt.s32.totalorder %v269, 128
  %vm286 = vcmp.lt.s32.totalorder %v270, 128
  %vm287 = vcmp.lt.s32.totalorder %v271, 128
  %vm288 = vcmp.lt.s32.totalorder %v272, 128
  %vm289 = vcmp.lt.s32.totalorder %v273, 128
  %vm290 = vcmp.lt.s32.totalorder %v274, 128
  %vm291 = vcmp.lt.s32.totalorder %v275, 128
  %vm292 = vcmp.lt.s32.totalorder %v276, 128
  %vm293 = vcmp.lt.s32.totalorder %v277, 128
  %v294 = vsel %vm278, %v165, 0.0
  %v295 = vsel %vm279, %v168, 0.0
  %v296 = vsel %vm280, %v173, 0.0
  %v297 = vsel %vm281, %v176, 0.0
  %v298 = vsel %vm282, %v181, 0.0
  %v299 = vsel %vm283, %v184, 0.0
  %v300 = vsel %vm284, %v189, 0.0
  %v301 = vsel %vm285, %v192, 0.0
  %v302 = vsel %vm286, %v197, 0.0
  %v303 = vsel %vm287, %v200, 0.0
  %v304 = vsel %vm288, %v205, 0.0
  %v305 = vsel %vm289, %v208, 0.0
  %v306 = vsel %vm290, %v213, 0.0
  %v307 = vsel %vm291, %v216, 0.0
  %v308 = vsel %vm292, %v221, 0.0
  %v309 = vsel %vm293, %v224, 0.0
  %v310 = vadd.f32 %v294, %v295
  %v311 = vadd.f32 %v310, %v296
  %v312 = vadd.f32 %v311, %v297
  %v313 = vadd.f32 %v312, %v298
  %v314 = vadd.f32 %v313, %v299
  %v315 = vadd.f32 %v314, %v300
  %v316 = vadd.f32 %v315, %v301
  %v317 = vadd.f32 %v316, %v302
  %v318 = vadd.f32 %v317, %v303
  %v319 = vadd.f32 %v318, %v304
  %v320 = vadd.f32 %v319, %v305
  %v321 = vadd.f32 %v320, %v306
  %v322 = vadd.f32 %v321, %v307
  %v323 = vadd.f32 %v322, %v308
  %v324 = vadd.f32 %v323, %v309
  %325 = vst [vmem:[%s4] sm:$0xff] %v324
  %v326 = vmul.f32 %v294, %v294
  %v327 = vmul.f32 %v295, %v295
  %v328 = vmul.f32 %v296, %v296
  %v329 = vmul.f32 %v297, %v297
  %v330 = vmul.f32 %v298, %v298
  %v331 = vmul.f32 %v299, %v299
  %v332 = vmul.f32 %v300, %v300
  %v333 = vmul.f32 %v301, %v301
  %v334 = vmul.f32 %v302, %v302
  %v335 = vmul.f32 %v303, %v303
  %v336 = vmul.f32 %v304, %v304
  %v337 = vmul.f32 %v305, %v305
  %v338 = vmul.f32 %v306, %v306
  %v339 = vmul.f32 %v307, %v307
  %v340 = vmul.f32 %v308, %v308
  %v341 = vmul.f32 %v309, %v309
  %v342 = vadd.f32 %v326, %v327
  %v343 = vadd.f32 %v342, %v328
  %v344 = vadd.f32 %v343, %v329
  %v345 = vadd.f32 %v344, %v330
  %v346 = vadd.f32 %v345, %v331
  %v347 = vadd.f32 %v346, %v332
  %v348 = vadd.f32 %v347, %v333
  %v349 = vadd.f32 %v348, %v334
  %v350 = vadd.f32 %v349, %v335
  %v351 = vadd.f32 %v350, %v336
  %v352 = vadd.f32 %v351, %v337
  %v353 = vadd.f32 %v352, %v338
  %v354 = vadd.f32 %v353, %v339
  %v355 = vadd.f32 %v354, %v340
  %v356 = vadd.f32 %v355, %v341
  %357 = vst [vmem:[%s5] sm:$0xff] %v356
  // Predicated region
  $region14: #{patch_embedding_forward.4} parent=0 // pred_check
    _
  $region15: #{patch_embedding_forward.4} parent=0 // pred_check_branch
    %359 = sbr.rel (0) target = $region17
  $region16: #{patch_embedding_forward.4} parent=0 // pred_region
    _
  $region17: #{patch_embedding_forward.4} parent=0 // pred_fallthru
    _
  // Predicated region
  $region18: #{patch_embedding_forward.4} parent=0 // pred_check
    _
  $region19: #{patch_embedding_forward.4} parent=0 // pred_check_branch
    %361 = sbr.rel (0) target = $region21
  $region20: #{patch_embedding_forward.4} parent=0 // pred_region
    _
  $region21: #{patch_embedding_forward.4} parent=0 // pred_fallthru
    _
  // Predicated region
  $region22: #{patch_embedding_forward.4} parent=0 // pred_check
    _
  $region23: #{patch_embedding_forward.4} parent=0 // pred_check_branch
    %363 = sbr.rel (0) target = $region25
  $region24: #{patch_embedding_forward.4} parent=0 // pred_region
    _
  $region25: #{patch_embedding_forward.4} parent=0 // pred_fallthru
    _
  // Predicated region
  $region26: #{patch_embedding_forward.4} parent=0 // pred_check
    _
  $region27: #{patch_embedding_forward.4} parent=0 // pred_check_branch
    %365 = sbr.rel (0) target = $region29
  $region28: #{patch_embedding_forward.4} parent=0 // pred_region
    _
  $region29: #{patch_embedding_forward.4} parent=0 // pred_fallthru
    _
  // Predicated region
  $region30: #{patch_embedding_forward.4} parent=0 // pred_check
    _
  $region31: #{patch_embedding_forward.4} parent=0 // pred_check_branch
    %367 = sbr.rel (0) target = $region33
  $region32: #{patch_embedding_forward.4} parent=0 // pred_region
    _
  $region33: #{patch_embedding_forward.4} parent=0 // pred_fallthru
    _
  // Predicated region
  $region34: #{patch_embedding_forward.4} parent=0 // pred_check
    _
  $region35: #{patch_embedding_forward.4} parent=0 // pred_check_branch
    %369 = sbr.rel (0) target = $region37
  $region36: #{patch_embedding_forward.4} parent=0 // pred_region
    _
  $region37: #{patch_embedding_forward.4} parent=0 // pred_fallthru
    _

// kernel: patch_embedding_forward.7
$region0: #{patch_embedding_forward.7}
  #allocation0 [shape = 'u32[]', space=smem, size = 0x4, offset = 0x4, fixed_abs, tag = 'smem constant byte address 0x4 - core index']
  #allocation1 [shape = 'u32[144,128]{1,0:T(1,128)}', space=vmem, size = 0x12000, scoped, tag = 'internal scratch']
  %s0 = inlined_call_operand.vmem [shape: f32[32,128], index: 0, kind: input, shape index: {}, may-alias: {0,5}]
  %s1 = inlined_call_operand.vmem [shape: f32[1,128], index: 1, kind: input, shape index: {}]
  %s2 = inlined_call_operand.vmem [shape: f32[1,128], index: 2, kind: input, shape index: {}]
  %s3 = inlined_call_operand.vmem [shape: f32[1,128], index: 3, kind: input, shape index: {}]
  %s4 = inlined_call_operand.vmem [shape: f32[1,128], index: 4, kind: input, shape index: {}]
  %s5 = inlined_call_operand.vmem [shape: f32[32,128], index: 5, kind: output, shape index: {}, may-alias: {0,5}]
  %s6 = sld [smem:[#allocation0]]
  $region30: #{patch_embedding_forward.7} parent=0
    _
  %s8 = ssub.s32 1, %s6
  %s9 = scalar_select 0, %s8, %s6
  // Predicated region
  $region2: #{patch_embedding_forward.7} parent=0 // pred_check
    _
  $region3: #{patch_embedding_forward.7} parent=0 // pred_check_branch
    %11 = sbr.rel (0) target = $region5
  $region4: #{patch_embedding_forward.7} parent=0 // pred_region
    _
  $region5: #{patch_embedding_forward.7} parent=0 // pred_fallthru
    _
  // Predicated region
  $region6: #{patch_embedding_forward.7} parent=0 // pred_check
    _
  $region7: #{patch_embedding_forward.7} parent=0 // pred_check_branch
    %13 = sbr.rel (0) target = $region9
  $region8: #{patch_embedding_forward.7} parent=0 // pred_region
    _
  $region9: #{patch_embedding_forward.7} parent=0 // pred_fallthru
    _
  // Predicated region
  $region10: #{patch_embedding_forward.7} parent=0 // pred_check
    _
  $region11: #{patch_embedding_forward.7} parent=0 // pred_check_branch
    %15 = sbr.rel (0) target = $region13
  $region12: #{patch_embedding_forward.7} parent=0 // pred_region
    _
  $region13: #{patch_embedding_forward.7} parent=0 // pred_fallthru
    _
  // Predicated region
  $region14: #{patch_embedding_forward.7} parent=0 // pred_check
    _
  $region15: #{patch_embedding_forward.7} parent=0 // pred_check_branch
    %17 = sbr.rel (0) target = $region17
  $region16: #{patch_embedding_forward.7} parent=0 // pred_region
    _
  $region17: #{patch_embedding_forward.7} parent=0 // pred_fallthru
    _
  // Predicated region
  $region18: #{patch_embedding_forward.7} parent=0 // pred_check
    _
  $region19: #{patch_embedding_forward.7} parent=0 // pred_check_branch
    %19 = sbr.rel (0) target = $region21
  $region20: #{patch_embedding_forward.7} parent=0 // pred_region
    _
  $region21: #{patch_embedding_forward.7} parent=0 // pred_fallthru
    _
  %v20 = vld [vmem:[%s0] sm:$0xff]
  %v21 = vld [vmem:[%s0 + $0x8] sm:$0xff]
  %v22 = vld [vmem:[%s0 + $0x10] sm:$0xff]
  %v23 = vld [vmem:[%s0 + $0x18] sm:$0xff]
  %v24 = vld [vmem:[%s1] sm:$0x1]
  %v26 = vlaneseq
  %v27 = vshrl.u32 %v26, 7
  %v28 = vsub.s32 0, %v27
  %v29 = vrot.slane %v24, %v28
  %v31 = vsub.f32 %v20, %v29
  %v32 = vsub.f32 %v21, %v29
  %v33 = vsub.f32 %v22, %v29
  %v34 = vsub.f32 %v23, %v29
  %v35 = vld [vmem:[%s2] sm:$0x1]
  %v37 = vlaneseq
  %v38 = vshrl.u32 %v37, 7
  %v39 = vsub.s32 0, %v38
  %v40 = vrot.slane %v35, %v39
  %v42 = vmul.f32 %v31, %v40
  %v43 = vmul.f32 %v32, %v40
  %v44 = vmul.f32 %v33, %v40
  %v45 = vmul.f32 %v34, %v40
  %v46 = vld [vmem:[%s3] sm:$0x1]
  %v48 = vlaneseq
  %v49 = vshrl.u32 %v48, 7
  %v50 = vsub.s32 0, %v49
  %v51 = vrot.slane %v46, %v50
  %v53 = vmul.f32 %v42, %v51
  %v54 = vmul.f32 %v43, %v51
  %v55 = vmul.f32 %v44, %v51
  %v56 = vmul.f32 %v45, %v51
  %v57 = vld [vmem:[%s4] sm:$0x1]
  %v59 = vlaneseq
  %v60 = vshrl.u32 %v59, 7
  %v61 = vsub.s32 0, %v60
  %v62 = vrot.slane %v57, %v61
  %v64 = vadd.f32 %v53, %v62
  %v65 = vadd.f32 %v54, %v62
  %v66 = vadd.f32 %v55, %v62
  %v67 = vadd.f32 %v56, %v62
  %v68 = vmax.f32 %v64, 0.0
  %v69 = vmax.f32 %v65, 0.0
  %v70 = vmax.f32 %v66, 0.0
  %v71 = vmax.f32 %v67, 0.0
  %72 = vst [vmem:[%s5] sm:$0xff] %v68
  %73 = vst [vmem:[%s5 + $0x8] sm:$0xff] %v69
  %74 = vst [vmem:[%s5 + $0x10] sm:$0xff] %v70
  %75 = vst [vmem:[%s5 + $0x18] sm:$0xff] %v71
  // Predicated region
  $region22: #{patch_embedding_forward.7} parent=0 // pred_check
    _
  $region23: #{patch_embedding_forward.7} parent=0 // pred_check_branch
    %77 = sbr.rel (0) target = $region25
  $region24: #{patch_embedding_forward.7} parent=0 // pred_region
    _
  $region25: #{patch_embedding_forward.7} parent=0 // pred_fallthru
    _
  // Predicated region
  $region26: #{patch_embedding_forward.7} parent=0 // pred_check
    _
  $region27: #{patch_embedding_forward.7} parent=0 // pred_check_branch
    %79 = sbr.rel (0) target = $region29
  $region28: #{patch_embedding_forward.7} parent=0 // pred_region
    _
  $region29: #{patch_embedding_forward.7} parent=0 // pred_fallthru
    _

// kernel: patch_embedding_forward.6
$region0: #{patch_embedding_forward.6}
  #allocation0 [shape = 'u32[]', space=smem, size = 0x4, offset = 0x4, fixed_abs, tag = 'smem constant byte address 0x4 - core index']
  #allocation1 [shape = 'u32[144,128]{1,0:T(1,128)}', space=vmem, size = 0x12000, scoped, tag = 'internal scratch']
  %s0 = inlined_call_operand.vmem [shape: bf16[32,144], index: 0, kind: input, shape index: {}]
  %s1 = inlined_call_operand.vmem [shape: bf16[144,128], index: 1, kind: input, shape index: {}]
  %s2 = inlined_call_operand.vmem [shape: f32[1,128], index: 2, kind: input, shape index: {}]
  %s3 = inlined_call_operand.vmem [shape: f32[32,128], index: 3, kind: output, shape index: {0}]
  %s4 = inlined_call_operand.vmem [shape: f32[8,128], index: 4, kind: output, shape index: {1}]
  %s5 = inlined_call_operand.vmem [shape: f32[8,128], index: 5, kind: output, shape index: {2}]
  %6 = xla_tuple %s3, %s4, %s5
  %s7 = sld [smem:[#allocation0]]
  $region38: #{patch_embedding_forward.6} parent=0
    _
  %s9 = ssub.s32 1, %s7
  %s10 = scalar_select 0, %s9, %s7
  // Predicated region
  $region2: #{patch_embedding_forward.6} parent=0 // pred_check
    _
  $region3: #{patch_embedding_forward.6} parent=0 // pred_check_branch
    %12 = sbr.rel (0) target = $region5
  $region4: #{patch_embedding_forward.6} parent=0 // pred_region
    _
  $region5: #{patch_embedding_forward.6} parent=0 // pred_fallthru
    _
  // Predicated region
  $region6: #{patch_embedding_forward.6} parent=0 // pred_check
    _
  $region7: #{patch_embedding_forward.6} parent=0 // pred_check_branch
    %14 = sbr.rel (0) target = $region9
  $region8: #{patch_embedding_forward.6} parent=0 // pred_region
    _
  $region9: #{patch_embedding_forward.6} parent=0 // pred_fallthru
    _
  // Predicated region
  $region10: #{patch_embedding_forward.6} parent=0 // pred_check
    _
  $region11: #{patch_embedding_forward.6} parent=0 // pred_check_branch
    %16 = sbr.rel (0) target = $region13
  $region12: #{patch_embedding_forward.6} parent=0 // pred_region
    _
  $region13: #{patch_embedding_forward.6} parent=0 // pred_fallthru
    _
  %v18 = vld [vmem:[%s0] sm:$0xff]
  %v19 = vld [vmem:[%s0 + $0x8] sm:$0xff]
  %v20 = vld [vmem:[%s0 + $0x10] sm:$0xff]
  %v21 = vld [vmem:[%s0 + $0x18] sm:$0xff]
  %v22 = vld [vmem:[%s1] sm:$0xf]
  %v23 = vld [vmem:[%s1 + $0x4] sm:$0xf]
  %v24 = vld [vmem:[%s1 + $0x8] sm:$0xf]
  %v25 = vld [vmem:[%s1 + $0xc] sm:$0xf]
  %v26 = vld [vmem:[%s1 + $0x10] sm:$0xf]
  %v27 = vld [vmem:[%s1 + $0x14] sm:$0xf]
  %v28 = vld [vmem:[%s1 + $0x18] sm:$0xf]
  %v29 = vld [vmem:[%s1 + $0x1c] sm:$0xf]
  %v30 = vld [vmem:[%s1 + $0x20] sm:$0xf]
  %v31 = vld [vmem:[%s1 + $0x24] sm:$0xf]
  %v32 = vld [vmem:[%s1 + $0x28] sm:$0xf]
  %v33 = vld [vmem:[%s1 + $0x2c] sm:$0xf]
  %v34 = vld [vmem:[%s1 + $0x30] sm:$0xf]
  %v35 = vld [vmem:[%s1 + $0x34] sm:$0xf]
  %v36 = vld [vmem:[%s1 + $0x38] sm:$0xf]
  %v37 = vld [vmem:[%s1 + $0x3c] sm:$0xf]
  %v38 = vld [vmem:[%s1 + $0x40] sm:$0xf]
  %v39 = vld [vmem:[%s1 + $0x44] sm:$0xf]
  %v40 = vld [vmem:[%s2] sm:$0x1]
  %v42 = vlaneseq
  %v43 = vshrl.u32 %v42, 7
  %v44 = vsub.s32 0, %v43
  %v45 = vrot.slane %v40, %v44
  %v51 = vunpack.c.l.b16 %v18
  %v52 = vunpack.c.h.b16 %v18
  %v53 = vunpack.c.l.b16 %v19
  %v54 = vunpack.c.h.b16 %v19
  %v55 = vunpack.c.l.b16 %v20
  %v56 = vunpack.c.h.b16 %v20
  %v57 = vunpack.c.l.b16 %v21
  %v58 = vunpack.c.h.b16 %v21
  %v59 = vpack.c.b16 %v53, %v51
  %v60 = vpack.c.b16 %v54, %v52
  %v61 = vpack.c.b16 %v57, %v55
  %v62 = vpack.c.b16 %v58, %v56
  %v83 = vunpack.c.l.b16 %v22
  %v84 = vunpack.c.l.b16 %v23
  %v85 = vunpack.c.l.b16 %v24
  %v86 = vunpack.c.l.b16 %v25
  %v87 = vunpack.c.l.b16 %v26
  %v88 = vunpack.c.l.b16 %v27
  %v89 = vunpack.c.l.b16 %v28
  %v90 = vunpack.c.l.b16 %v29
  %v91 = vunpack.c.l.b16 %v30
  %v92 = vunpack.c.l.b16 %v31
  %v93 = vunpack.c.l.b16 %v32
  %v94 = vunpack.c.l.b16 %v33
  %v95 = vunpack.c.l.b16 %v34
  %v96 = vunpack.c.l.b16 %v35
  %v97 = vunpack.c.l.b16 %v36
  %v98 = vunpack.c.l.b16 %v37
  %v99 = vunpack.c.l.b16 %v38
  %v100 = vunpack.c.l.b16 %v39
  %v101 = vpack.c.b16 %v84, %v83
  %v102 = vpack.c.b16 %v86, %v85
  %v103 = vpack.c.b16 %v88, %v87
  %v104 = vpack.c.b16 %v90, %v89
  %v105 = vpack.c.b16 %v92, %v91
  %v106 = vpack.c.b16 %v94, %v93
  %v107 = vpack.c.b16 %v96, %v95
  %v108 = vpack.c.b16 %v98, %v97
  %v109 = vpack.c.b16 %v100, %v99
  %vm119 = vcmask 130048
  %v121 = vsel %vm119, %v60, 0
  %v124 = vsel %vm119, %v62, 0
  %126 = vmatprep.subr.bf16.mxu0 0
  %127 = vmatpush1.bf16.msra.mxu0 %v101
  %128 = vmatprep.subr.bf16.mxu0 0
  %129 = vmatpush1.bf16.msra.mxu0 %v102
  %130 = vmatprep.subr.bf16.mxu0 0
  %131 = vmatpush1.bf16.msra.mxu0 %v103
  %132 = vmatprep.subr.bf16.mxu0 0
  %133 = vmatpush1.bf16.msra.mxu0 %v104
  %134 = vmatprep.subr.bf16.mxu0 0
  %135 = vmatpush1.bf16.msra.mxu0 %v105
  %136 = vmatprep.subr.bf16.mxu0 0
  %137 = vmatpush1.bf16.msra.mxu0 %v106
  %138 = vmatprep.subr.bf16.mxu0 0
  %139 = vmatpush1.bf16.msra.mxu0 %v107
  %140 = vmatprep.subr.bf16.mxu0 0
  %141 = vmatpush1.bf16.msra.mxu0 %v108
  %142 = vmatprep.subr.bf16.mxu0 0
  %143 = vmatpush1.bf16.msra.mxu0 %v109
  %144 = vmatprep.subr.bf16.mxu0 0
  %145 = vmatpush1.bf16.msra.mxu0 0
  %146 = vmatprep.subr.bf16.mxu0 0
  %147 = vmatpush1.bf16.msra.mxu0 0
  %148 = vmatprep.subr.bf16.mxu0 0
  %149 = vmatpush1.bf16.msra.mxu0 0
  %150 = vmatprep.subr.bf16.mxu0 0
  %151 = vmatpush1.bf16.msra.mxu0 0
  %152 = vmatprep.subr.bf16.mxu0 0
  %153 = vmatpush1.bf16.msra.mxu0 0
  %154 = vmatprep.subr.bf16.mxu0 0
  %155 = vmatpush1.bf16.msra.mxu0 0
  %156 = vmatprep.subr.bf16.mxu0 0
  %157 = vmatpush1.bf16.msra.mxu0 0
  %158 = vmatprep.mubr.bf16.mxu0 %v121
  %159 = vmatmul.mubr.bf16.gmra.mrb[0].mxu0 %v59
  %v160 = vpop.f32.mrb[0].mxu0
  %v161 = vadd.f32 %v45, %v160
  %v162 = vpop.f32.mrb[0].mxu0
  %v163 = vpop.f32.mrb[0].mxu0
  %v164 = vadd.f32 %v45, %v163
  %v165 = vpop.f32.mrb[0].mxu0
  %166 = vmatprep.mubr.bf16.mxu0 %v124
  %167 = vmatmul.mubr.bf16.gmra.mrb[0].mxu0 %v61
  %v168 = vpop.f32.mrb[0].mxu0
  %v169 = vadd.f32 %v45, %v168
  %v170 = vpop.f32.mrb[0].mxu0
  %v171 = vpop.f32.mrb[0].mxu0
  %v172 = vadd.f32 %v45, %v171
  %v173 = vpop.f32.mrb[0].mxu0
  %174 = vdwg.mxu0
  %175 = vst [vmem:[%s3] sm:$0xff] %v161
  %176 = vst [vmem:[%s3 + $0x8] sm:$0xff] %v164
  %177 = vst [vmem:[%s3 + $0x10] sm:$0xff] %v169
  %178 = vst [vmem:[%s3 + $0x18] sm:$0xff] %v172
  %v179 = vlaneseq
  %v180 = vshrl.u32 %v179, 7
  %v181 = vadd.s32 %v180, 8
  %v182 = vadd.s32 %v180, 16
  %v183 = vadd.s32 %v180, 24
  %s184 = smul.u32 0, 32
  %v185 = vstv %s184
  %v186 = vadd.s32 %v180, %v185
  %v187 = vadd.s32 %v181, %v185
  %v188 = vadd.s32 %v182, %v185
  %v189 = vadd.s32 %v183, %v185
  %vm190 = vcmp.lt.s32.totalorder %v186, 32
  %vm191 = vcmp.lt.s32.totalorder %v187, 32
  %vm192 = vcmp.lt.s32.totalorder %v188, 32
  %vm193 = vcmp.lt.s32.totalorder %v189, 32
  %v194 = vsel %vm190, %v161, 0.0
  %v195 = vsel %vm191, %v164, 0.0
  %v196 = vsel %vm192, %v169, 0.0
  %v197 = vsel %vm193, %v172, 0.0
  %v198 = vadd.f32 %v194, %v195
  %v199 = vadd.f32 %v198, %v196
  %v200 = vadd.f32 %v199, %v197
  %201 = vst [vmem:[%s4] sm:$0xff] %v200
  %v202 = vmul.f32 %v194, %v194
  %v203 = vmul.f32 %v195, %v195
  %v204 = vmul.f32 %v196, %v196
  %v205 = vmul.f32 %v197, %v197
  %v206 = vadd.f32 %v202, %v203
  %v207 = vadd.f32 %v206, %v204
  %v208 = vadd.f32 %v207, %v205
  %209 = vst [vmem:[%s5] sm:$0xff] %v208
  // Predicated region
  $region14: #{patch_embedding_forward.6} parent=0 // pred_check
    _
  $region15: #{patch_embedding_forward.6} parent=0 // pred_check_branch
    %211 = sbr.rel (0) target = $region17
  $region16: #{patch_embedding_forward.6} parent=0 // pred_region
    _
  $region17: #{patch_embedding_forward.6} parent=0 // pred_fallthru
    _
  // Predicated region
  $region18: #{patch_embedding_forward.6} parent=0 // pred_check
    _
  $region19: #{patch_embedding_forward.6} parent=0 // pred_check_branch
    %213 = sbr.rel (0) target = $region21
  $region20: #{patch_embedding_forward.6} parent=0 // pred_region
    _
  $region21: #{patch_embedding_forward.6} parent=0 // pred_fallthru
    _
  // Predicated region
  $region22: #{patch_embedding_forward.6} parent=0 // pred_check
    _
  $region23: #{patch_embedding_forward.6} parent=0 // pred_check_branch
    %215 = sbr.rel (0) target = $region25
  $region24: #{patch_embedding_forward.6} parent=0 // pred_region
    _
  $region25: #{patch_embedding_forward.6} parent=0 // pred_fallthru
    _
  // Predicated region
  $region26: #{patch_embedding_forward.6} parent=0 // pred_check
    _
  $region27: #{patch_embedding_forward.6} parent=0 // pred_check_branch
    %217 = sbr.rel (0) target = $region29
  $region28: #{patch_embedding_forward.6} parent=0 // pred_region
    _
  $region29: #{patch_embedding_forward.6} parent=0 // pred_fallthru
    _
  // Predicated region
  $region30: #{patch_embedding_forward.6} parent=0 // pred_check
    _
  $region31: #{patch_embedding_forward.6} parent=0 // pred_check_branch
    %219 = sbr.rel (0) target = $region33
  $region32: #{patch_embedding_forward.6} parent=0 // pred_region
    _
  $region33: #{patch_embedding_forward.6} parent=0 // pred_fallthru
    _
  // Predicated region
  $region34: #{patch_embedding_forward.6} parent=0 // pred_check
    _
  $region35: #{patch_embedding_forward.6} parent=0 // pred_check_branch
    %221 = sbr.rel (0) target = $region37
  $region36: #{patch_embedding_forward.6} parent=0 // pred_region
    _
  $region37: #{patch_embedding_forward.6} parent=0 // pred_fallthru
    _

</llo_original>
